<compile_context>
chip_gen: v6e
topology: v6e:2x2x1
jax: 0.10.0
libtpu: 0.0.40
codegen_flags: <defaults>
</compile_context>

<pallas_src>
import jax
import jax.numpy as jnp
from jax.experimental import pallas as pl
from jax.experimental.pallas import tpu as pltpu

LAYER_SIZES = [2, 32, 32, 32, 1]   # config.layer_sizes[0] for the `u` net
DEFAULT_TILE_N = 1024              # batch (lane) tile per grid step


def _round_up(a, b):
    return ((a + b - 1) // b) * b


def _mlp_kernel(x_ref,            # (2, TILE_N)        feature-major input
                w0_ref, b0_ref,   # (32, 2), (32, 1)   first layer (feature-major)
                wh_ref, bh_ref,   # (2, 32, 32), (2, 32, 1) stacked hidden layers
                w3_ref, b3_ref,   # (1, 32), (1, 1)    output layer
                out_ref):         # (1, TILE_N)
    x = x_ref[...]

    # Layer 0 (2 -> 32): K=2 matmul replaced by two VPU broadcast-multiply-adds
    # on already-resident, lane-dense vregs (frees the MXU push slot).
    h = jnp.tanh(w0_ref[:, 0:1] * x[0:1, :]
                 + w0_ref[:, 1:2] * x[1:2, :]
                 + b0_ref[...])                                   # (32, TILE_N)

    # Hidden layers (32 -> 32): MXU matmuls with f32 accumulation, tanh on EUP.
    h = jnp.tanh(
        jnp.dot(wh_ref[0], h, preferred_element_type=jnp.float32)
        + bh_ref[0])                                              # (32, TILE_N)
    h = jnp.tanh(
        jnp.dot(wh_ref[1], h, preferred_element_type=jnp.float32)
        + bh_ref[1])                                              # (32, TILE_N)

    # Output layer (32 -> 1), no activation; result stays lane-dense (1, TILE_N).
    out = (jnp.dot(w3_ref[...], h, preferred_element_type=jnp.float32)
           + b3_ref[...])
    out_ref[...] = out.astype(out_ref.dtype)


def burgers_net_forward(x, params, *, tile_n=DEFAULT_TILE_N):
    """Forward pass of BurgersNet: u(x). x: [N, 2] float32 -> [N, 1] float32."""
    n, in_dim = x.shape
    assert in_dim == LAYER_SIZES[0]

    # Tile must be a multiple of 128 lanes; cap it so the "parallel" grid axis
    # keeps >= 2 steps when N allows (both TensorCores get work on v7x).
    tile_n = max(128, min(int(tile_n), _round_up(pl.cdiv(n, 2), 128)))
    n_pad = _round_up(n, tile_n)
    grid = (n_pad // tile_n,)

    # Feature-major, zero-padded input: [2, N_pad]. Padded columns are zeros, so
    # they flow through tanh(bias) harmlessly and are sliced off at the end.
    x_fm = jnp.pad(x, ((0, n_pad - n), (0, 0))).T

    # Re-layout params to feature-major (out, in) / (out, 1); stack the two
    # 32x32 hidden layers into single operands.
    (w0, b0), (w1, b1), (w2, b2), (w3, b3) = params
    w0t, b0t = w0.T, b0.T                        # (32, 2), (32, 1)
    wh = jnp.stack([w1.T, w2.T])                 # (2, 32, 32)
    bh = jnp.stack([b1.T, b2.T])                 # (2, 32, 1)
    w3t, b3t = w3.T, b3.T                        # (1, 32), (1, 1)

    in_specs = [
        pl.BlockSpec((in_dim, tile_n), lambda i: (0, i)),   # x (feature-major)
        pl.BlockSpec(w0t.shape, lambda i: (0, 0)),
        pl.BlockSpec(b0t.shape, lambda i: (0, 0)),
        pl.BlockSpec(wh.shape, lambda i: (0, 0, 0)),
        pl.BlockSpec(bh.shape, lambda i: (0, 0, 0)),
        pl.BlockSpec(w3t.shape, lambda i: (0, 0)),
        pl.BlockSpec(b3t.shape, lambda i: (0, 0)),
    ]
    out_specs = pl.BlockSpec((1, tile_n), lambda i: (0, i))  # lane-dense output

    param_bytes = 4 * sum(int(p.size) for pair in params for p in pair)
    cost = pl.CostEstimate(
        flops=2 * n_pad * (2 * 32 + 32 * 32 + 32 * 32 + 32 * 1),
        transcendentals=n_pad * 3 * 32,
        bytes_accessed=n_pad * (in_dim + 1) * 4 + param_bytes,
    )

    out_fm = pl.pallas_call(
        _mlp_kernel,
        out_shape=jax.ShapeDtypeStruct((1, n_pad), jnp.float32),
        grid_spec=pltpu.PrefetchScalarGridSpec(
            num_scalar_prefetch=0,
            grid=grid,
            in_specs=in_specs,
            out_specs=out_specs,
        ),
        compiler_params=pltpu.CompilerParams(
            dimension_semantics=("parallel",)),
        cost_estimate=cost,
    )(x_fm, w0t, b0t, wh, bh, w3t, b3t)

    # Back to sample-major [N, 1] (layout plumbing only, done by XLA outside).
    return out_fm[:, :n].T


def init_params(key, layer_sizes):
    """Deterministic Glorot-style init, weights stored as (in, out)."""
    params = []
    for fan_in, fan_out in zip(layer_sizes[:-1], layer_sizes[1:]):
        key, kw, kb = jax.random.split(key, 3)
        limit = jnp.sqrt(6.0 / (fan_in + fan_out))
        w = jax.random.uniform(kw, (fan_in, fan_out), jnp.float32,
                               minval=-limit, maxval=limit)
        b = jax.random.uniform(kb, (1, fan_out), jnp.float32,
                               minval=-0.01, maxval=0.01)
        params.append((w, b))
    return params


def reference_forward(x, params):
    h = x
    for i, (w, b) in enumerate(params):
        h = h @ w + b
        if i < len(params) - 1:
            h = jnp.tanh(h)
    return h


if __name__ == "__main__":
    key = jax.random.PRNGKey(0)
    key, kx = jax.random.split(key)

    # Collocation points (t, x) in [0,1] x [-1,1]; batch = 256 points
    # (not a multiple of the default tile -> exercises the padding path too).
    n = 256
    t = jax.random.uniform(kx, (n, 1), jnp.float32, minval=0.0, maxval=1.0)
    xs = jax.random.uniform(jax.random.fold_in(kx, 1), (n, 1), jnp.float32,
                            minval=-1.0, maxval=1.0)
    x = jnp.concatenate([t, xs], axis=1)  # [N, 2]

    params = init_params(jax.random.PRNGKey(42), LAYER_SIZES)

    u = burgers_net_forward(x, params)
    u = jax.block_until_ready(u)

    u_ref = reference_forward(x, params)
    assert u.shape == (n, 1)
    assert jnp.allclose(u, u_ref, atol=3e-5, rtol=3e-5), "mismatch vs reference"

    # TODO(synk): interior/init/bc losses need autodiff w.r.t. inputs (torch
    # gradients); those stay in plain JAX (jax.grad over this forward) and are
    # not part of the kernel hot path.

    print("KERNEL_OK")
</pallas_src>

<mosaic_0001>
module attributes {stable_mosaic.version = 11 : i64} {
  func.func @_mlp_kernel(%arg0: i32, %arg1: memref<2x128xf32, #tpu.memory_space<vmem>>, %arg2: memref<32x2xf32, #tpu.memory_space<vmem>>, %arg3: memref<32x1xf32, #tpu.memory_space<vmem>>, %arg4: memref<2x32x32xf32, #tpu.memory_space<vmem>>, %arg5: memref<2x32x1xf32, #tpu.memory_space<vmem>>, %arg6: memref<1x32xf32, #tpu.memory_space<vmem>>, %arg7: memref<1x1xf32, #tpu.memory_space<vmem>>, %arg8: memref<1x128xf32, #tpu.memory_space<vmem>>) attributes {dimension_semantics = [#tpu.dimension_semantics<parallel>], iteration_bounds = array<i64: 2>, scalar_prefetch = 0 : i64, scratch_operands = 0 : i64, tpu.core_type = #tpu.core_type<tc>, window_params = [{transform_indices = @transform_0, window_bounds = array<i64: 2, 128>}, {pipeline_mode = #tpu.pipeline_mode<synchronous>, transform_indices = @transform_1, window_bounds = array<i64: 32, 2>}, {pipeline_mode = #tpu.pipeline_mode<synchronous>, transform_indices = @transform_2, window_bounds = array<i64: 32, 1>}, {pipeline_mode = #tpu.pipeline_mode<synchronous>, transform_indices = @transform_3, window_bounds = array<i64: 2, 32, 32>}, {pipeline_mode = #tpu.pipeline_mode<synchronous>, transform_indices = @transform_4, window_bounds = array<i64: 2, 32, 1>}, {pipeline_mode = #tpu.pipeline_mode<synchronous>, transform_indices = @transform_5, window_bounds = array<i64: 1, 32>}, {pipeline_mode = #tpu.pipeline_mode<synchronous>, transform_indices = @transform_6, window_bounds = array<i64: 1, 1>}, {transform_indices = @transform_7, window_bounds = array<i64: 1, 128>}]} {
    %c0 = arith.constant 0 : index
    %c0_0 = arith.constant 0 : index
    %0 = vector.load %arg1[%c0, %c0_0] : memref<2x128xf32, #tpu.memory_space<vmem>>, vector<2x128xf32>
    %c0_1 = arith.constant 0 : index
    %c0_2 = arith.constant 0 : index
    %1 = vector.load %arg2[%c0_1, %c0_2] : memref<32x2xf32, #tpu.memory_space<vmem>>, vector<32x1xf32>
    %2 = vector.extract_strided_slice %0 {offsets = [0, 0], sizes = [1, 128], strides = [1, 1]} : vector<2x128xf32> to vector<1x128xf32>
    %3 = vector.broadcast %1 : vector<32x1xf32> to vector<32x128xf32>
    %4 = vector.broadcast %2 : vector<1x128xf32> to vector<32x128xf32>
    %5 = arith.mulf %3, %4 : vector<32x128xf32>
    %c0_3 = arith.constant 0 : index
    %c1 = arith.constant 1 : index
    %6 = vector.load %arg2[%c0_3, %c1] : memref<32x2xf32, #tpu.memory_space<vmem>>, vector<32x1xf32>
    %7 = vector.extract_strided_slice %0 {offsets = [1, 0], sizes = [1, 128], strides = [1, 1]} : vector<2x128xf32> to vector<1x128xf32>
    %8 = vector.broadcast %6 : vector<32x1xf32> to vector<32x128xf32>
    %9 = vector.broadcast %7 : vector<1x128xf32> to vector<32x128xf32>
    %10 = arith.mulf %8, %9 : vector<32x128xf32>
    %11 = arith.addf %5, %10 : vector<32x128xf32>
    %c0_4 = arith.constant 0 : index
    %c0_5 = arith.constant 0 : index
    %12 = vector.load %arg3[%c0_4, %c0_5] : memref<32x1xf32, #tpu.memory_space<vmem>>, vector<32x1xf32>
    %13 = vector.broadcast %12 : vector<32x1xf32> to vector<32x128xf32>
    %14 = arith.addf %11, %13 : vector<32x128xf32>
    %15 = math.tanh %14 : vector<32x128xf32>
    %c0_6 = arith.constant 0 : index
    %c0_7 = arith.constant 0 : index
    %c0_8 = arith.constant 0 : index
    %16 = vector.load %arg4[%c0_6, %c0_7, %c0_8] : memref<2x32x32xf32, #tpu.memory_space<vmem>>, vector<1x32x32xf32>
    %17 = vector.shape_cast %16 : vector<1x32x32xf32> to vector<32x32xf32>
    %cst = arith.constant dense<0.000000e+00> : vector<32x128xf32>
    %18 = tpu.matmul %17, %15, %cst {dimension_numbers = #tpu.dot_dimension_numbers<[1], [0], [0], [1], [0, 0, 1, 1], [], []>} : vector<32x32xf32>, vector<32x128xf32>, vector<32x128xf32> -> vector<32x128xf32>
    %c0_9 = arith.constant 0 : index
    %c0_10 = arith.constant 0 : index
    %c0_11 = arith.constant 0 : index
    %19 = vector.load %arg5[%c0_9, %c0_10, %c0_11] : memref<2x32x1xf32, #tpu.memory_space<vmem>>, vector<1x32x1xf32>
    %20 = vector.shape_cast %19 : vector<1x32x1xf32> to vector<32x1xf32>
    %21 = vector.broadcast %20 : vector<32x1xf32> to vector<32x128xf32>
    %22 = arith.addf %18, %21 : vector<32x128xf32>
    %23 = math.tanh %22 : vector<32x128xf32>
    %c1_12 = arith.constant 1 : index
    %c0_13 = arith.constant 0 : index
    %c0_14 = arith.constant 0 : index
    %24 = vector.load %arg4[%c1_12, %c0_13, %c0_14] : memref<2x32x32xf32, #tpu.memory_space<vmem>>, vector<1x32x32xf32>
    %25 = vector.shape_cast %24 : vector<1x32x32xf32> to vector<32x32xf32>
    %cst_15 = arith.constant dense<0.000000e+00> : vector<32x128xf32>
    %26 = tpu.matmul %25, %23, %cst_15 {dimension_numbers = #tpu.dot_dimension_numbers<[1], [0], [0], [1], [0, 0, 1, 1], [], []>} : vector<32x32xf32>, vector<32x128xf32>, vector<32x128xf32> -> vector<32x128xf32>
    %c1_16 = arith.constant 1 : index
    %c0_17 = arith.constant 0 : index
    %c0_18 = arith.constant 0 : index
    %27 = vector.load %arg5[%c1_16, %c0_17, %c0_18] : memref<2x32x1xf32, #tpu.memory_space<vmem>>, vector<1x32x1xf32>
    %28 = vector.shape_cast %27 : vector<1x32x1xf32> to vector<32x1xf32>
    %29 = vector.broadcast %28 : vector<32x1xf32> to vector<32x128xf32>
    %30 = arith.addf %26, %29 : vector<32x128xf32>
    %31 = math.tanh %30 : vector<32x128xf32>
    %c0_19 = arith.constant 0 : index
    %c0_20 = arith.constant 0 : index
    %32 = vector.load %arg6[%c0_19, %c0_20] : memref<1x32xf32, #tpu.memory_space<vmem>>, vector<1x32xf32>
    %cst_21 = arith.constant dense<0.000000e+00> : vector<1x128xf32>
    %33 = tpu.matmul %32, %31, %cst_21 {dimension_numbers = #tpu.dot_dimension_numbers<[1], [0], [0], [1], [0, 0, 1, 1], [], []>} : vector<1x32xf32>, vector<32x128xf32>, vector<1x128xf32> -> vector<1x128xf32>
    %c0_22 = arith.constant 0 : index
    %c0_23 = arith.constant 0 : index
    %34 = vector.load %arg7[%c0_22, %c0_23] : memref<1x1xf32, #tpu.memory_space<vmem>>, vector<1x1xf32>
    %35 = vector.broadcast %34 : vector<1x1xf32> to vector<1x128xf32>
    %36 = arith.addf %33, %35 : vector<1x128xf32>
    %c0_24 = arith.constant 0 : index
    %c0_25 = arith.constant 0 : index
    %37 = vector.load %arg8[%c0_24, %c0_25] : memref<1x128xf32, #tpu.memory_space<vmem>>, vector<1x128xf32>
    tpu.vector_store %arg8[%c0_24, %c0_25], %36 {strides = array<i32>} : memref<1x128xf32, #tpu.memory_space<vmem>>, vector<1x128xf32>,
    return
  }
  func.func @transform_0(%arg0: i32) -> (i32, i32) {
    %c0_i32 = arith.constant 0 : i32
    %c0_i32_0 = arith.constant 0 : i32
    return %c0_i32, %arg0 : i32, i32
  }
  func.func @transform_1(%arg0: i32) -> (i32, i32) {
    %c0_i32 = arith.constant 0 : i32
    %c0_i32_0 = arith.constant 0 : i32
    %c0_i32_1 = arith.constant 0 : i32
    return %c0_i32, %c0_i32_0 : i32, i32
  }
  func.func @transform_2(%arg0: i32) -> (i32, i32) {
    %c0_i32 = arith.constant 0 : i32
    %c0_i32_0 = arith.constant 0 : i32
    %c0_i32_1 = arith.constant 0 : i32
    return %c0_i32, %c0_i32_0 : i32, i32
  }
  func.func @transform_3(%arg0: i32) -> (i32, i32, i32) {
    %c0_i32 = arith.constant 0 : i32
    %c0_i32_0 = arith.constant 0 : i32
    %c0_i32_1 = arith.constant 0 : i32
    %c0_i32_2 = arith.constant 0 : i32
    return %c0_i32, %c0_i32_0, %c0_i32_1 : i32, i32, i32
  }
  func.func @transform_4(%arg0: i32) -> (i32, i32, i32) {
    %c0_i32 = arith.constant 0 : i32
    %c0_i32_0 = arith.constant 0 : i32
    %c0_i32_1 = arith.constant 0 : i32
    %c0_i32_2 = arith.constant 0 : i32
    return %c0_i32, %c0_i32_0, %c0_i32_1 : i32, i32, i32
  }
  func.func @transform_5(%arg0: i32) -> (i32, i32) {
    %c0_i32 = arith.constant 0 : i32
    %c0_i32_0 = arith.constant 0 : i32
    %c0_i32_1 = arith.constant 0 : i32
    return %c0_i32, %c0_i32_0 : i32, i32
  }
  func.func @transform_6(%arg0: i32) -> (i32, i32) {
    %c0_i32 = arith.constant 0 : i32
    %c0_i32_0 = arith.constant 0 : i32
    %c0_i32_1 = arith.constant 0 : i32
    return %c0_i32, %c0_i32_0 : i32, i32
  }
  func.func @transform_7(%arg0: i32) -> (i32, i32) {
    %c0_i32 = arith.constant 0 : i32
    %c0_i32_0 = arith.constant 0 : i32
    return %c0_i32, %arg0 : i32, i32
  }
}

</mosaic_0001>

<llo_original>
// kernel: tpu_custom_call.1
$region0: #{tpu_custom_call.1}
  #allocation0 [shape = 'u32[]', space=smem, size = 0x4, offset = 0x4, fixed_abs, tag = 'smem constant byte address 0x4 - core index']
  #allocation1 [shape = 'u32[144,128]{1,0:T(1,128)}', space=vmem, size = 0x12000, scoped, tag = 'internal scratch']
  #allocation2 [shape = 'f32[1,1]{1,0:T(1,128)S(1)}', space=vmem, size = 0x200, scoped, tag = 'scoped memory for tpu_custom_call.1']
  %s0 = inlined_call_operand.vmem [shape: f32[2,256], index: 0, kind: input, shape index: {}]
  %s1 = inlined_call_operand.vmem [shape: f32[32,2], index: 1, kind: input, shape index: {}]
  %s2 = inlined_call_operand.vmem [shape: f32[32,1], index: 2, kind: input, shape index: {}]
  %s3 = inlined_call_operand.vmem [shape: f32[2,32,32], index: 3, kind: input, shape index: {}]
  %s4 = inlined_call_operand.vmem [shape: f32[2,32,1], index: 4, kind: input, shape index: {}]
  %s5 = inlined_call_operand.vmem [shape: f32[1,32], index: 5, kind: input, shape index: {}]
  %s6 = inlined_call_operand.<no memory space> [shape: f32[1,1], index: 6, kind: input, shape index: {}]
  %s7 = inlined_call_operand.hbm [shape: f32[1,256], index: 7, kind: output, shape index: {}]
  %s8 = sld [smem:[#allocation0]]
  $region61: #{tpu_custom_call.1} parent=0
    _
  %s10 = ssub.s32 1, %s8
  %s11 = scalar_select 0, %s10, %s8
  %v12 = vstv %s6
  %13 = vst [vmem:[#allocation2] sm:$0x1] %v12
  $region1: #{tpu_custom_call.1} parent=0
    #allocation3 [shape = 'u8[1024]{0}', space=vmem, size = 0x400, scoped, tag = 'output window, operand 0']
    #allocation4 [shape = 's32[2]{0}', space=sflag, size = 0x8, scoped, tag = 'scoped memory for tpu_custom_call.1']
    %14 = vsyncpa [#allocation4], 0
    %s15 = scalar_lea.sflag [#allocation4], 1
    %16 = vsyncpa %s15, 0
    loop: start=0, step=1, limit=4
    $region2: #{tpu_custom_call.1} parent=1 // loop_pre_header
      _
    $region3: #{tpu_custom_call.1} parent=1 // loop_header
      %s18 = sphi 0, %s22
      %p19 = scmp.ge.s32.totalorder %s18, 4
      %s28 = sphi 0, %s30
      %s31 = sphi 0, %s28
      %s32 = sphi 0, %s31
      %s48 = sphi 0, %s32
      %s52 = sphi 0, %s52
      %s54 = sphi 0, %s52
      %s55 = sphi 0, %s54
      %s69 = sphi 0, %s55
      %s73 = sphi 0, %s73
      %s75 = sphi 0, %s73
      %s76 = sphi 0, %s75
      %s90 = sphi 0, %s76
      %s94 = sphi 0, %s94
      %s96 = sphi 0, %s94
      %s97 = sphi 0, %s96
      %s111 = sphi 0, %s97
      %s115 = sphi 0, %s115
      %s117 = sphi 0, %s115
      %s118 = sphi 0, %s117
      %s132 = sphi 0, %s118
      %s136 = sphi 0, %s136
      %s138 = sphi 0, %s136
      %s139 = sphi 0, %s138
      %s153 = sphi 0, %s139
      %s157 = sphi 0, %s157
      %s159 = sphi 0, %s157
      %s160 = sphi 0, %s159
      %s174 = sphi 0, %s160
      %s180 = sphi 0, %s182
      %s183 = sphi 0, %s180
      %s184 = sphi 0, %s183
      %s200 = sphi 0, %s184
    $region4: #{tpu_custom_call.1} parent=1 // loop_header_branch
      %21 = sbr.rel (%p19) target = $region8
    $region5: #{tpu_custom_call.1} parent=1 // loop_body
      %s23 = ssub.s32 %s18, 1
      %s24 = ssub.s32 %s18, 2
      %s25 = sadd.s32 %s18, 1
      %s26 = ssub.s32 %s18, %s25
      %p27 = scmp.eq.s32.totalorder %s26, 0
      %s29 = sadd.s32 %s28, 1
      %s30 = scalar_select %p27, %s28, %s29
      %p33 = pneg %p27
      %p34 = scmp.eq.s32.totalorder %s18, 1
      %p35 = por %p33, %p34
      %p36 = scmp.ne.s32.totalorder %s28, %s31
      %p37 = scmp.eq.s32.totalorder %s18, 0
      %p38 = por %p36, %p37
      %p39 = scmp.ne.s32.totalorder %s28, %s31
      %p40 = scmp.eq.s32.totalorder %s23, 1
      %p41 = por %p39, %p40
      %p42 = scmp.ne.s32.totalorder %s31, %s32
      %p43 = scmp.eq.s32.totalorder %s23, 0
      %p44 = por %p42, %p43
      %p45 = scmp.ne.s32.totalorder %s31, %s32
      %p46 = scmp.eq.s32.totalorder %s24, 1
      %p47 = por %p45, %p46
      %p49 = scmp.ne.s32.totalorder %s32, %s48
      %p50 = scmp.eq.s32.totalorder %s24, 0
      %p51 = por %p49, %p50
      %s53 = sadd.s32 %s52, 1
      %p56 = scmp.eq.s32.totalorder %s18, 1
      %p57 = scmp.ne.s32.totalorder %s52, %s54
      %p58 = scmp.eq.s32.totalorder %s18, 0
      %p59 = por %p57, %p58
      %p60 = scmp.ne.s32.totalorder %s52, %s54
      %p61 = scmp.eq.s32.totalorder %s23, 1
      %p62 = por %p60, %p61
      %p63 = scmp.ne.s32.totalorder %s54, %s55
      %p64 = scmp.eq.s32.totalorder %s23, 0
      %p65 = por %p63, %p64
      %p66 = scmp.ne.s32.totalorder %s54, %s55
      %p67 = scmp.eq.s32.totalorder %s24, 1
      %p68 = por %p66, %p67
      %p70 = scmp.ne.s32.totalorder %s55, %s69
      %p71 = scmp.eq.s32.totalorder %s24, 0
      %p72 = por %p70, %p71
      %s74 = sadd.s32 %s73, 1
      %p77 = scmp.eq.s32.totalorder %s18, 1
      %p78 = scmp.ne.s32.totalorder %s73, %s75
      %p79 = scmp.eq.s32.totalorder %s18, 0
      %p80 = por %p78, %p79
      %p81 = scmp.ne.s32.totalorder %s73, %s75
      %p82 = scmp.eq.s32.totalorder %s23, 1
      %p83 = por %p81, %p82
      %p84 = scmp.ne.s32.totalorder %s75, %s76
      %p85 = scmp.eq.s32.totalorder %s23, 0
      %p86 = por %p84, %p85
      %p87 = scmp.ne.s32.totalorder %s75, %s76
      %p88 = scmp.eq.s32.totalorder %s24, 1
      %p89 = por %p87, %p88
      %p91 = scmp.ne.s32.totalorder %s76, %s90
      %p92 = scmp.eq.s32.totalorder %s24, 0
      %p93 = por %p91, %p92
      %s95 = sadd.s32 %s94, 1
      %p98 = scmp.eq.s32.totalorder %s18, 1
      %p99 = scmp.ne.s32.totalorder %s94, %s96
      %p100 = scmp.eq.s32.totalorder %s18, 0
      %p101 = por %p99, %p100
      %p102 = scmp.ne.s32.totalorder %s94, %s96
      %p103 = scmp.eq.s32.totalorder %s23, 1
      %p104 = por %p102, %p103
      %p105 = scmp.ne.s32.totalorder %s96, %s97
      %p106 = scmp.eq.s32.totalorder %s23, 0
      %p107 = por %p105, %p106
      %p108 = scmp.ne.s32.totalorder %s96, %s97
      %p109 = scmp.eq.s32.totalorder %s24, 1
      %p110 = por %p108, %p109
      %p112 = scmp.ne.s32.totalorder %s97, %s111
      %p113 = scmp.eq.s32.totalorder %s24, 0
      %p114 = por %p112, %p113
      %s116 = sadd.s32 %s115, 1
      %p119 = scmp.eq.s32.totalorder %s18, 1
      %p120 = scmp.ne.s32.totalorder %s115, %s117
      %p121 = scmp.eq.s32.totalorder %s18, 0
      %p122 = por %p120, %p121
      %p123 = scmp.ne.s32.totalorder %s115, %s117
      %p124 = scmp.eq.s32.totalorder %s23, 1
      %p125 = por %p123, %p124
      %p126 = scmp.ne.s32.totalorder %s117, %s118
      %p127 = scmp.eq.s32.totalorder %s23, 0
      %p128 = por %p126, %p127
      %p129 = scmp.ne.s32.totalorder %s117, %s118
      %p130 = scmp.eq.s32.totalorder %s24, 1
      %p131 = por %p129, %p130
      %p133 = scmp.ne.s32.totalorder %s118, %s132
      %p134 = scmp.eq.s32.totalorder %s24, 0
      %p135 = por %p133, %p134
      %s137 = sadd.s32 %s136, 1
      %p140 = scmp.eq.s32.totalorder %s18, 1
      %p141 = scmp.ne.s32.totalorder %s136, %s138
      %p142 = scmp.eq.s32.totalorder %s18, 0
      %p143 = por %p141, %p142
      %p144 = scmp.ne.s32.totalorder %s136, %s138
      %p145 = scmp.eq.s32.totalorder %s23, 1
      %p146 = por %p144, %p145
      %p147 = scmp.ne.s32.totalorder %s138, %s139
      %p148 = scmp.eq.s32.totalorder %s23, 0
      %p149 = por %p147, %p148
      %p150 = scmp.ne.s32.totalorder %s138, %s139
      %p151 = scmp.eq.s32.totalorder %s24, 1
      %p152 = por %p150, %p151
      %p154 = scmp.ne.s32.totalorder %s139, %s153
      %p155 = scmp.eq.s32.totalorder %s24, 0
      %p156 = por %p154, %p155
      %s158 = sadd.s32 %s157, 1
      %p161 = scmp.eq.s32.totalorder %s18, 1
      %p162 = scmp.ne.s32.totalorder %s157, %s159
      %p163 = scmp.eq.s32.totalorder %s18, 0
      %p164 = por %p162, %p163
      %p165 = scmp.ne.s32.totalorder %s157, %s159
      %p166 = scmp.eq.s32.totalorder %s23, 1
      %p167 = por %p165, %p166
      %p168 = scmp.ne.s32.totalorder %s159, %s160
      %p169 = scmp.eq.s32.totalorder %s23, 0
      %p170 = por %p168, %p169
      %p171 = scmp.ne.s32.totalorder %s159, %s160
      %p172 = scmp.eq.s32.totalorder %s24, 1
      %p173 = por %p171, %p172
      %p175 = scmp.ne.s32.totalorder %s160, %s174
      %p176 = scmp.eq.s32.totalorder %s24, 0
      %p177 = por %p175, %p176
      %s178 = ssub.s32 %s18, %s25
      %p179 = scmp.eq.s32.totalorder %s178, 0
      %s181 = sadd.s32 %s180, 1
      %s182 = scalar_select %p179, %s180, %s181
      %p185 = pneg %p179
      %p186 = scmp.eq.s32.totalorder %s18, 1
      %p187 = por %p185, %p186
      %p188 = scmp.ne.s32.totalorder %s180, %s183
      %p189 = scmp.eq.s32.totalorder %s18, 0
      %p190 = por %p188, %p189
      %p191 = scmp.ne.s32.totalorder %s180, %s183
      %p192 = scmp.eq.s32.totalorder %s23, 1
      %p193 = por %p191, %p192
      %p194 = scmp.ne.s32.totalorder %s183, %s184
      %p195 = scmp.eq.s32.totalorder %s23, 0
      %p196 = por %p194, %p195
      %p197 = scmp.ne.s32.totalorder %s183, %s184
      %p198 = scmp.eq.s32.totalorder %s24, 1
      %p199 = por %p197, %p198
      %p201 = scmp.ne.s32.totalorder %s184, %s200
      %p202 = scmp.eq.s32.totalorder %s24, 0
      %p203 = por %p201, %p202
      %p204 = scmp.le.s32.totalorder 1, %s18
      %p205 = scmp.lt.s32.totalorder %s18, 3
      %p206 = pnand %p204, %p205
      %p207 = pneg %p206
      // Predicated region
      $region9: #{tpu_custom_call.1} parent=5 // pred_check
        _
      $region10: #{tpu_custom_call.1} parent=5 // pred_check_branch
        %209 = sbr.rel (%p206) target = $region12
      $region11: #{tpu_custom_call.1} parent=5 // pred_region
        %s210 = ssub.s32 %s18, 1
        // Predicated region
        $region13: #{tpu_custom_call.1} parent=11 // pred_check
          %p211 = pneg %p65
        $region14: #{tpu_custom_call.1} parent=11 // pred_check_branch
          %213 = sbr.rel (%p211) target = $region16
        $region15: #{tpu_custom_call.1} parent=11 // pred_region
          _
        $region16: #{tpu_custom_call.1} parent=11 // pred_fallthru
          _
        // Predicated region
        $region17: #{tpu_custom_call.1} parent=11 // pred_check
          %p214 = pneg %p86
        $region18: #{tpu_custom_call.1} parent=11 // pred_check_branch
          %216 = sbr.rel (%p214) target = $region20
        $region19: #{tpu_custom_call.1} parent=11 // pred_region
          _
        $region20: #{tpu_custom_call.1} parent=11 // pred_fallthru
          _
        // Predicated region
        $region21: #{tpu_custom_call.1} parent=11 // pred_check
          %p217 = pneg %p107
        $region22: #{tpu_custom_call.1} parent=11 // pred_check_branch
          %219 = sbr.rel (%p217) target = $region24
        $region23: #{tpu_custom_call.1} parent=11 // pred_region
          _
        $region24: #{tpu_custom_call.1} parent=11 // pred_fallthru
          _
        // Predicated region
        $region25: #{tpu_custom_call.1} parent=11 // pred_check
          %p220 = pneg %p128
        $region26: #{tpu_custom_call.1} parent=11 // pred_check_branch
          %222 = sbr.rel (%p220) target = $region28
        $region27: #{tpu_custom_call.1} parent=11 // pred_region
          _
        $region28: #{tpu_custom_call.1} parent=11 // pred_fallthru
          _
        // Predicated region
        $region29: #{tpu_custom_call.1} parent=11 // pred_check
          %p223 = pneg %p149
        $region30: #{tpu_custom_call.1} parent=11 // pred_check_branch
          %225 = sbr.rel (%p223) target = $region32
        $region31: #{tpu_custom_call.1} parent=11 // pred_region
          _
        $region32: #{tpu_custom_call.1} parent=11 // pred_fallthru
          _
        // Predicated region
        $region33: #{tpu_custom_call.1} parent=11 // pred_check
          %p226 = pneg %p170
        $region34: #{tpu_custom_call.1} parent=11 // pred_check_branch
          %228 = sbr.rel (%p226) target = $region36
        $region35: #{tpu_custom_call.1} parent=11 // pred_region
          _
        $region36: #{tpu_custom_call.1} parent=11 // pred_fallthru
          _
      $region12: #{tpu_custom_call.1} parent=5 // pred_fallthru
        _
      %p229 = scmp.lt.s32.totalorder %s18, 2
      // Predicated region
      $region37: #{tpu_custom_call.1} parent=5 // pred_check
        %p230 = pneg %p229
      $region38: #{tpu_custom_call.1} parent=5 // pred_check_branch
        %232 = sbr.rel (%p230) target = $region40
      $region39: #{tpu_custom_call.1} parent=5 // pred_region
        // Predicated region
        $region41: #{tpu_custom_call.1} parent=39 // pred_check
          %p233 = pneg %p38
        $region42: #{tpu_custom_call.1} parent=39 // pred_check_branch
          %235 = sbr.rel (%p233) target = $region44
        $region43: #{tpu_custom_call.1} parent=39 // pred_region
          %p236 = scmp.lt.s32.totalorder %s18, 1
          %s237 = scalar_select %p236, %s18, 1
          %s238 = smul.addr %s237, 2
          %s239 = scalar_lea.vmem %s0, %s238
        $region44: #{tpu_custom_call.1} parent=39 // pred_fallthru
          _
      $region40: #{tpu_custom_call.1} parent=5 // pred_fallthru
        _
      %p240 = scmp.le.s32.totalorder 1, %s18
      %p241 = scmp.lt.s32.totalorder %s18, 3
      %p242 = pnand %p240, %p241
      %p243 = pneg %p242
      // Predicated region
      $region45: #{tpu_custom_call.1} parent=5 // pred_check
        _
      $region46: #{tpu_custom_call.1} parent=5 // pred_check_branch
        %245 = sbr.rel (%p242) target = $region48
      $region47: #{tpu_custom_call.1} parent=5 // pred_region
        %s246 = ssub.s32 %s18, 1
        %p247 = scmp.lt.s32.totalorder %s23, 1
        %s248 = scalar_select %p247, %s23, 1
        %s249 = smul.addr %s248, 2
        %s250 = scalar_lea.vmem %s0, %s249
        %p251 = pneg %p44
        %p252 = pneg %p41
        %p253 = pneg %p65
        %p254 = pneg %p62
        %p255 = pneg %p86
        %p256 = pneg %p83
        %p257 = pneg %p107
        %p258 = pneg %p104
        %p259 = pneg %p128
        %p260 = pneg %p125
        %p261 = pneg %p149
        %p262 = pneg %p146
        %p263 = pneg %p170
        %p264 = pneg %p167
        %p265 = pneg %p196
        %p266 = pneg %p193
        %s267 = sand.u32 %s183, 1
        %s268 = scalar_lea.sflag [#allocation4], %s267
        %s269 = sand.u32 %s183, 1
        %s270 = scalar_lea.vmem [#allocation3], %s269
        %p271 = scmp.lt.s32.totalorder %s23, 1
        %s272 = scalar_select %p271, %s23, 1
        %s273 = smul.addr %s272, 2
        %s274 = scalar_lea.vmem %s0, %s273
        %v275 = vld [vmem:[%s274] sm:$0x3]
        %v276 = vld [vmem:[%s1] sm:$0xff]
        %v277 = vld [vmem:[%s1 + $0x8] sm:$0xff]
        %v278 = vld [vmem:[%s1 + $0x10] sm:$0xff]
        %v279 = vld [vmem:[%s1 + $0x18] sm:$0xff]
        %281 = vset.pattern.permute.xlu0 0
        %282 = vperm.xlu0 %281, %v276
        %v283 = vpop.permute.xlu0 %282
        %286 = vset.pattern.permute.xlu0 0
        %287 = vperm.xlu0 %286, %v277
        %v288 = vpop.permute.xlu0 %287
        %291 = vset.pattern.permute.xlu0 0
        %292 = vperm.xlu0 %291, %v278
        %v293 = vpop.permute.xlu0 %292
        %296 = vset.pattern.permute.xlu0 0
        %297 = vperm.xlu0 %296, %v279
        %v298 = vpop.permute.xlu0 %297
        %v300 = vlaneseq
        %v301 = vshrl.u32 %v300, 7
        %v302 = vsub.s32 0, %v301
        %v303 = vrot.slane %v275, %v302
        %v304 = vmul.f32 %v283, %v303
        %v305 = vmul.f32 %v288, %v303
        %v306 = vmul.f32 %v293, %v303
        %v307 = vmul.f32 %v298, %v303
        %308 = vset.pattern.permute.xlu0 1
        %309 = vperm.xlu0 %308, %v276
        %v310 = vpop.permute.xlu0 %309
        %312 = vset.pattern.permute.xlu0 1
        %313 = vperm.xlu0 %312, %v277
        %v314 = vpop.permute.xlu0 %313
        %316 = vset.pattern.permute.xlu0 1
        %317 = vperm.xlu0 %316, %v278
        %v318 = vpop.permute.xlu0 %317
        %320 = vset.pattern.permute.xlu0 1
        %321 = vperm.xlu0 %320, %v279
        %v322 = vpop.permute.xlu0 %321
        %v324 = vlaneseq
        %v325 = vshrl.u32 %v324, 7
        %v326 = vsub.s32 1, %v325
        %v327 = vrot.slane %v275, %v326
        %v328 = vmul.f32 %v310, %v327
        %v329 = vmul.f32 %v314, %v327
        %v330 = vmul.f32 %v318, %v327
        %v331 = vmul.f32 %v322, %v327
        %v332 = vadd.f32 %v304, %v328
        %v333 = vadd.f32 %v305, %v329
        %v334 = vadd.f32 %v306, %v330
        %v335 = vadd.f32 %v307, %v331
        %v336 = vld [vmem:[%s2] sm:$0xff]
        %v337 = vld [vmem:[%s2 + $0x8] sm:$0xff]
        %v338 = vld [vmem:[%s2 + $0x10] sm:$0xff]
        %v339 = vld [vmem:[%s2 + $0x18] sm:$0xff]
        %341 = vset.pattern.permute.xlu0 0
        %342 = vperm.xlu0 %341, %v336
        %v343 = vpop.permute.xlu0 %342
        %346 = vset.pattern.permute.xlu0 0
        %347 = vperm.xlu0 %346, %v337
        %v348 = vpop.permute.xlu0 %347
        %351 = vset.pattern.permute.xlu0 0
        %352 = vperm.xlu0 %351, %v338
        %v353 = vpop.permute.xlu0 %352
        %356 = vset.pattern.permute.xlu0 0
        %357 = vperm.xlu0 %356, %v339
        %v358 = vpop.permute.xlu0 %357
        %v360 = vadd.f32 %v332, %v343
        %v361 = vadd.f32 %v333, %v348
        %v362 = vadd.f32 %v334, %v353
        %v363 = vadd.f32 %v335, %v358
        %v364 = vtanh.pop %v360
        %v365 = vtanh.pop %v361
        %v366 = vtanh.pop %v362
        %v367 = vtanh.pop %v363
        %v368 = vld [vmem:[%s3] sm:$0xff]
        %v369 = vld [vmem:[%s3 + $0x8] sm:$0xff]
        %v370 = vld [vmem:[%s3 + $0x10] sm:$0xff]
        %v371 = vld [vmem:[%s3 + $0x18] sm:$0xff]
        %v372 = vld [vmem:[%s4] sm:$0xff]
        %v373 = vld [vmem:[%s4 + $0x8] sm:$0xff]
        %v374 = vld [vmem:[%s4 + $0x10] sm:$0xff]
        %v375 = vld [vmem:[%s4 + $0x18] sm:$0xff]
        %377 = vset.pattern.permute.xlu0 0
        %378 = vperm.xlu0 %377, %v372
        %v379 = vpop.permute.xlu0 %378
        %382 = vset.pattern.permute.xlu0 0
        %383 = vperm.xlu0 %382, %v373
        %v384 = vpop.permute.xlu0 %383
        %387 = vset.pattern.permute.xlu0 0
        %388 = vperm.xlu0 %387, %v374
        %v389 = vpop.permute.xlu0 %388
        %392 = vset.pattern.permute.xlu0 0
        %393 = vperm.xlu0 %392, %v375
        %v394 = vpop.permute.xlu0 %393
        %vm396 = vcmask 261120
        %v398 = vsel %vm396, %v368, 0
        %v401 = vsel %vm396, %v369, 0
        %v404 = vsel %vm396, %v370, 0
        %v407 = vsel %vm396, %v371, 0
        %409 = vmatprep.subr.mxu0 0.0
        %410 = vmatpush1.msra.mxu0 0.0
        %411 = vmatprep.subr.mxu0 0.0
        %412 = vmatpush1.msra.mxu0 0.0
        %413 = vmatprep.subr.mxu0 0.0
        %414 = vmatpush1.msra.mxu0 0.0
        %415 = vmatprep.subr.mxu0 0.0
        %416 = vmatpush1.msra.mxu0 0.0
        %417 = vmatprep.subr.mxu0 0.0
        %418 = vmatpush1.msra.mxu0 0.0
        %419 = vmatprep.subr.mxu0 0.0
        %420 = vmatpush1.msra.mxu0 0.0
        %421 = vmatprep.subr.mxu0 0.0
        %422 = vmatpush1.msra.mxu0 0.0
        %423 = vmatprep.subr.mxu0 0.0
        %424 = vmatpush1.msra.mxu0 0.0
        %425 = vmatprep.subr.mxu0 0.0
        %426 = vmatpush1.msra.mxu0 0.0
        %427 = vmatprep.subr.mxu0 0.0
        %428 = vmatpush1.msra.mxu0 0.0
        %429 = vmatprep.subr.mxu0 0.0
        %430 = vmatpush1.msra.mxu0 0.0
        %431 = vmatprep.subr.mxu0 0.0
        %432 = vmatpush1.msra.mxu0 0.0
        %433 = vmatprep.subr.mxu0 0.0
        %434 = vmatpush1.msra.mxu0 %v367
        %435 = vmatprep.subr.mxu0 0.0
        %436 = vmatpush1.msra.mxu0 %v366
        %437 = vmatprep.subr.mxu0 0.0
        %438 = vmatpush1.msra.mxu0 %v365
        %439 = vmatprep.subr.mxu0 0.0
        %440 = vmatpush1.msra.mxu0 %v364
        %441 = vmatprep.subr.mxu0 0.0
        %442 = vmatpush2.msra.mxu0 0.0
        %443 = vmatprep.subr.mxu0 0.0
        %444 = vmatpush2.msra.mxu0 0.0
        %445 = vmatprep.subr.mxu0 0.0
        %446 = vmatpush2.msra.mxu0 0.0
        %447 = vmatprep.subr.mxu0 0.0
        %448 = vmatpush2.msra.mxu0 0.0
        %449 = vmatprep.subr.mxu0 0.0
        %450 = vmatpush2.msra.mxu0 0.0
        %451 = vmatprep.subr.mxu0 0.0
        %452 = vmatpush2.msra.mxu0 0.0
        %453 = vmatprep.subr.mxu0 0.0
        %454 = vmatpush2.msra.mxu0 0.0
        %455 = vmatprep.subr.mxu0 0.0
        %456 = vmatpush2.msra.mxu0 0.0
        %457 = vmatprep.subr.mxu0 0.0
        %458 = vmatpush2.msra.mxu0 0.0
        %459 = vmatprep.subr.mxu0 0.0
        %460 = vmatpush2.msra.mxu0 0.0
        %461 = vmatprep.subr.mxu0 0.0
        %462 = vmatpush2.msra.mxu0 0.0
        %463 = vmatprep.subr.mxu0 0.0
        %464 = vmatpush2.msra.mxu0 0.0
        %465 = vmatprep.subr.mxu0 0.0
        %466 = vmatpush2.msra.mxu0 0.0
        %467 = vmatprep.subr.mxu0 0.0
        %468 = vmatpush2.msra.mxu0 0.0
        %469 = vmatprep.subr.mxu0 0.0
        %470 = vmatpush2.msra.mxu0 0.0
        %471 = vmatprep.subr.mxu0 0.0
        %472 = vmatpush2.msra.mxu0 0.0
        %473 = vmatprep.mubr.f32.mxu0 0.0
        %474 = vmatmul.mubr.f32.gmra.mxu0 %v398
        %v475 = vpop.f32.mrf.mxu0
        %v476 = vadd.f32 %v379, %v475
        %v477 = vpop.f32.mrf.mxu0
        %478 = vmatprep.mubr.f32.mxu0 0.0
        %479 = vmatmul.mubr.f32.gmra.mxu0 %v401
        %v480 = vpop.f32.mrf.mxu0
        %v481 = vadd.f32 %v384, %v480
        %v482 = vpop.f32.mrf.mxu0
        %483 = vmatprep.mubr.f32.mxu0 0.0
        %484 = vmatmul.mubr.f32.gmra.mxu0 %v404
        %v485 = vpop.f32.mrf.mxu0
        %v486 = vadd.f32 %v389, %v485
        %v487 = vpop.f32.mrf.mxu0
        %488 = vmatprep.mubr.f32.mxu0 0.0
        %489 = vmatmul.mubr.f32.gmra.mxu0 %v407
        %v490 = vpop.f32.mrf.mxu0
        %v491 = vadd.f32 %v394, %v490
        %v492 = vpop.f32.mrf.mxu0
        %493 = vdwg.mxu0
        %v494 = vtanh.pop %v476
        %v495 = vtanh.pop %v481
        %v496 = vtanh.pop %v486
        %v497 = vtanh.pop %v491
        %s498 = scalar_lea.vmem %s3, 32
        %v499 = vld [vmem:[%s498] sm:$0xff]
        %v500 = vld [vmem:[%s498 + $0x8] sm:$0xff]
        %v501 = vld [vmem:[%s498 + $0x10] sm:$0xff]
        %v502 = vld [vmem:[%s498 + $0x18] sm:$0xff]
        %s503 = scalar_lea.vmem %s4, 32
        %v504 = vld [vmem:[%s503] sm:$0xff]
        %v505 = vld [vmem:[%s503 + $0x8] sm:$0xff]
        %v506 = vld [vmem:[%s503 + $0x10] sm:$0xff]
        %v507 = vld [vmem:[%s503 + $0x18] sm:$0xff]
        %509 = vset.pattern.permute.xlu0 0
        %510 = vperm.xlu0 %509, %v504
        %v511 = vpop.permute.xlu0 %510
        %514 = vset.pattern.permute.xlu0 0
        %515 = vperm.xlu0 %514, %v505
        %v516 = vpop.permute.xlu0 %515
        %519 = vset.pattern.permute.xlu0 0
        %520 = vperm.xlu0 %519, %v506
        %v521 = vpop.permute.xlu0 %520
        %524 = vset.pattern.permute.xlu0 0
        %525 = vperm.xlu0 %524, %v507
        %v526 = vpop.permute.xlu0 %525
        %v529 = vsel %vm396, %v499, 0
        %v532 = vsel %vm396, %v500, 0
        %v535 = vsel %vm396, %v501, 0
        %v538 = vsel %vm396, %v502, 0
        %540 = vmatprep.subr.mxu0 0.0
        %541 = vmatpush1.msra.mxu0 0.0
        %542 = vmatprep.subr.mxu0 0.0
        %543 = vmatpush1.msra.mxu0 0.0
        %544 = vmatprep.subr.mxu0 0.0
        %545 = vmatpush1.msra.mxu0 0.0
        %546 = vmatprep.subr.mxu0 0.0
        %547 = vmatpush1.msra.mxu0 0.0
        %548 = vmatprep.subr.mxu0 0.0
        %549 = vmatpush1.msra.mxu0 0.0
        %550 = vmatprep.subr.mxu0 0.0
        %551 = vmatpush1.msra.mxu0 0.0
        %552 = vmatprep.subr.mxu0 0.0
        %553 = vmatpush1.msra.mxu0 0.0
        %554 = vmatprep.subr.mxu0 0.0
        %555 = vmatpush1.msra.mxu0 0.0
        %556 = vmatprep.subr.mxu0 0.0
        %557 = vmatpush1.msra.mxu0 0.0
        %558 = vmatprep.subr.mxu0 0.0
        %559 = vmatpush1.msra.mxu0 0.0
        %560 = vmatprep.subr.mxu0 0.0
        %561 = vmatpush1.msra.mxu0 0.0
        %562 = vmatprep.subr.mxu0 0.0
        %563 = vmatpush1.msra.mxu0 0.0
        %564 = vmatprep.subr.mxu0 0.0
        %565 = vmatpush1.msra.mxu0 %v497
        %566 = vmatprep.subr.mxu0 0.0
        %567 = vmatpush1.msra.mxu0 %v496
        %568 = vmatprep.subr.mxu0 0.0
        %569 = vmatpush1.msra.mxu0 %v495
        %570 = vmatprep.subr.mxu0 0.0
        %571 = vmatpush1.msra.mxu0 %v494
        %572 = vmatprep.subr.mxu0 0.0
        %573 = vmatpush2.msra.mxu0 0.0
        %574 = vmatprep.subr.mxu0 0.0
        %575 = vmatpush2.msra.mxu0 0.0
        %576 = vmatprep.subr.mxu0 0.0
        %577 = vmatpush2.msra.mxu0 0.0
        %578 = vmatprep.subr.mxu0 0.0
        %579 = vmatpush2.msra.mxu0 0.0
        %580 = vmatprep.subr.mxu0 0.0
        %581 = vmatpush2.msra.mxu0 0.0
        %582 = vmatprep.subr.mxu0 0.0
        %583 = vmatpush2.msra.mxu0 0.0
        %584 = vmatprep.subr.mxu0 0.0
        %585 = vmatpush2.msra.mxu0 0.0
        %586 = vmatprep.subr.mxu0 0.0
        %587 = vmatpush2.msra.mxu0 0.0
        %588 = vmatprep.subr.mxu0 0.0
        %589 = vmatpush2.msra.mxu0 0.0
        %590 = vmatprep.subr.mxu0 0.0
        %591 = vmatpush2.msra.mxu0 0.0
        %592 = vmatprep.subr.mxu0 0.0
        %593 = vmatpush2.msra.mxu0 0.0
        %594 = vmatprep.subr.mxu0 0.0
        %595 = vmatpush2.msra.mxu0 0.0
        %596 = vmatprep.subr.mxu0 0.0
        %597 = vmatpush2.msra.mxu0 0.0
        %598 = vmatprep.subr.mxu0 0.0
        %599 = vmatpush2.msra.mxu0 0.0
        %600 = vmatprep.subr.mxu0 0.0
        %601 = vmatpush2.msra.mxu0 0.0
        %602 = vmatprep.subr.mxu0 0.0
        %603 = vmatpush2.msra.mxu0 0.0
        %604 = vmatprep.mubr.f32.mxu0 0.0
        %605 = vmatmul.mubr.f32.gmra.mxu0 %v529
        %v606 = vpop.f32.mrf.mxu0
        %v607 = vadd.f32 %v511, %v606
        %v608 = vpop.f32.mrf.mxu0
        %609 = vmatprep.mubr.f32.mxu0 0.0
        %610 = vmatmul.mubr.f32.gmra.mxu0 %v532
        %v611 = vpop.f32.mrf.mxu0
        %v612 = vadd.f32 %v516, %v611
        %v613 = vpop.f32.mrf.mxu0
        %614 = vmatprep.mubr.f32.mxu0 0.0
        %615 = vmatmul.mubr.f32.gmra.mxu0 %v535
        %v616 = vpop.f32.mrf.mxu0
        %v617 = vadd.f32 %v521, %v616
        %v618 = vpop.f32.mrf.mxu0
        %619 = vmatprep.mubr.f32.mxu0 0.0
        %620 = vmatmul.mubr.f32.gmra.mxu0 %v538
        %v621 = vpop.f32.mrf.mxu0
        %v622 = vadd.f32 %v526, %v621
        %v623 = vpop.f32.mrf.mxu0
        %624 = vdwg.mxu0
        %v625 = vtanh.pop %v607
        %v626 = vtanh.pop %v612
        %v627 = vtanh.pop %v617
        %v628 = vtanh.pop %v622
        %v629 = vld [vmem:[%s5] sm:$0x1]
        %v630 = vld [vmem:[#allocation2] sm:$0x1]
        %632 = vset.pattern.permute.xlu0 0
        %633 = vperm.xlu0 %632, %v630
        %v634 = vpop.permute.xlu0 %633
        %v636 = vlaneseq
        %v637 = vshrl.u32 %v636, 7
        %v638 = vsub.s32 0, %v637
        %v639 = vrot.slane %v634, %v638
        %v641 = vsel %vm396, %v629, 0
        %643 = vmatprep.subr.mxu0 0.0
        %644 = vmatpush1.msra.mxu0 0.0
        %645 = vmatprep.subr.mxu0 0.0
        %646 = vmatpush1.msra.mxu0 0.0
        %647 = vmatprep.subr.mxu0 0.0
        %648 = vmatpush1.msra.mxu0 0.0
        %649 = vmatprep.subr.mxu0 0.0
        %650 = vmatpush1.msra.mxu0 0.0
        %651 = vmatprep.subr.mxu0 0.0
        %652 = vmatpush1.msra.mxu0 0.0
        %653 = vmatprep.subr.mxu0 0.0
        %654 = vmatpush1.msra.mxu0 0.0
        %655 = vmatprep.subr.mxu0 0.0
        %656 = vmatpush1.msra.mxu0 0.0
        %657 = vmatprep.subr.mxu0 0.0
        %658 = vmatpush1.msra.mxu0 0.0
        %659 = vmatprep.subr.mxu0 0.0
        %660 = vmatpush1.msra.mxu0 0.0
        %661 = vmatprep.subr.mxu0 0.0
        %662 = vmatpush1.msra.mxu0 0.0
        %663 = vmatprep.subr.mxu0 0.0
        %664 = vmatpush1.msra.mxu0 0.0
        %665 = vmatprep.subr.mxu0 0.0
        %666 = vmatpush1.msra.mxu0 0.0
        %667 = vmatprep.subr.mxu0 0.0
        %668 = vmatpush1.msra.mxu0 %v628
        %669 = vmatprep.subr.mxu0 0.0
        %670 = vmatpush1.msra.mxu0 %v627
        %671 = vmatprep.subr.mxu0 0.0
        %672 = vmatpush1.msra.mxu0 %v626
        %673 = vmatprep.subr.mxu0 0.0
        %674 = vmatpush1.msra.mxu0 %v625
        %675 = vmatprep.subr.mxu0 0.0
        %676 = vmatpush2.msra.mxu0 0.0
        %677 = vmatprep.subr.mxu0 0.0
        %678 = vmatpush2.msra.mxu0 0.0
        %679 = vmatprep.subr.mxu0 0.0
        %680 = vmatpush2.msra.mxu0 0.0
        %681 = vmatprep.subr.mxu0 0.0
        %682 = vmatpush2.msra.mxu0 0.0
        %683 = vmatprep.subr.mxu0 0.0
        %684 = vmatpush2.msra.mxu0 0.0
        %685 = vmatprep.subr.mxu0 0.0
        %686 = vmatpush2.msra.mxu0 0.0
        %687 = vmatprep.subr.mxu0 0.0
        %688 = vmatpush2.msra.mxu0 0.0
        %689 = vmatprep.subr.mxu0 0.0
        %690 = vmatpush2.msra.mxu0 0.0
        %691 = vmatprep.subr.mxu0 0.0
        %692 = vmatpush2.msra.mxu0 0.0
        %693 = vmatprep.subr.mxu0 0.0
        %694 = vmatpush2.msra.mxu0 0.0
        %695 = vmatprep.subr.mxu0 0.0
        %696 = vmatpush2.msra.mxu0 0.0
        %697 = vmatprep.subr.mxu0 0.0
        %698 = vmatpush2.msra.mxu0 0.0
        %699 = vmatprep.subr.mxu0 0.0
        %700 = vmatpush2.msra.mxu0 0.0
        %701 = vmatprep.subr.mxu0 0.0
        %702 = vmatpush2.msra.mxu0 0.0
        %703 = vmatprep.subr.mxu0 0.0
        %704 = vmatpush2.msra.mxu0 0.0
        %705 = vmatprep.subr.mxu0 0.0
        %706 = vmatpush2.msra.mxu0 0.0
        %707 = vmatprep.mubr.f32.mxu0 0.0
        %708 = vmatmul.mubr.f32.gmra.mxu0 %v641
        %v709 = vpop.f32.mrf.mxu0
        %v710 = vadd.f32 %v639, %v709
        %v711 = vpop.f32.mrf.mxu0
        %712 = vdwg.mxu0
        %713 = vst [vmem:[%s270] sm:$0x1] %v710
        %s714 = sand.u32 %s183, 1
        %s715 = scalar_lea.sflag [#allocation4], %s714
        %s716 = sand.u32 %s183, 1
        %s717 = scalar_lea.vmem [#allocation3], %s716
        // Predicated region
        $region49: #{tpu_custom_call.1} parent=47 // pred_check
          %p718 = pneg %p193
        $region50: #{tpu_custom_call.1} parent=47 // pred_check_branch
          %720 = sbr.rel (%p718) target = $region52
        $region51: #{tpu_custom_call.1} parent=47 // pred_region
          %s722 = ssub.s32 16, 16
          %723 = vsyncadd %s715, %s722
          %s724 = smul.addr %s23, 16
          %s725 = scalar_lea.hbm %s7, %s724
          %s727 = sshll.u32 %s717, 4
          %s728 = int_to_ptr.vmem [resolvable:$true] %s727
          %730 = dma.vmem_to_hbm [thread:$0]  %s728, 16, %s725, %s715
        $region52: #{tpu_custom_call.1} parent=47 // pred_fallthru
          _
      $region48: #{tpu_custom_call.1} parent=5 // pred_fallthru
        _
      %p731 = scmp.le.s32.totalorder 2, %s18
      // Predicated region
      $region53: #{tpu_custom_call.1} parent=5 // pred_check
        %p732 = pneg %p731
      $region54: #{tpu_custom_call.1} parent=5 // pred_check_branch
        %734 = sbr.rel (%p732) target = $region56
      $region55: #{tpu_custom_call.1} parent=5 // pred_region
        %s735 = ssub.s32 %s18, 2
        // Predicated region
        $region57: #{tpu_custom_call.1} parent=55 // pred_check
          %p736 = pneg %p199
        $region58: #{tpu_custom_call.1} parent=55 // pred_check_branch
          %738 = sbr.rel (%p736) target = $region60
        $region59: #{tpu_custom_call.1} parent=55 // pred_region
          %s739 = sand.u32 %s184, 1
          %s740 = scalar_lea.sflag [#allocation4], %s739
          %s741 = sand.u32 %s184, 1
          %s742 = scalar_lea.vmem [#allocation3], %s741
          %743 = dma.done %s740, 16
        $region60: #{tpu_custom_call.1} parent=55 // pred_fallthru
          _
      $region56: #{tpu_custom_call.1} parent=5 // pred_fallthru
        _
    $region6: #{tpu_custom_call.1} parent=1 // loop_footer
      %s22 = sadd.s32 1, %s18
    $region7: #{tpu_custom_call.1} parent=1 // loop_footer_branch
      %17 = sbr.rel target = $region3
    $region8: #{tpu_custom_call.1} parent=1 // loop_exit
      _
    %744 = vsyncpa [#allocation4], 1
    %s745 = scalar_lea.sflag [#allocation4], 1
    %746 = vsyncpa %s745, 1

</llo_original>
